<compile_context>
chip_gen: v6e
topology: v6e:2x2x1
jax: 0.10.0
libtpu: 0.0.40
codegen_flags: <defaults>
</compile_context>

<pallas_src>
import jax
import jax.numpy as jnp
from jax.experimental import pallas as pl
from jax.experimental.pallas import tpu as pltpu


def _add_relu_matmul_kernel(w_ref, a_ref, b_ref, o_ref):
    # w_ref: (C_out, C_in) bf16 | a_ref/b_ref: (C_in, M) bf16 (batch squeezed)
    # o_ref: (C_out, M) f32
    x = jnp.maximum(a_ref[...] + b_ref[...], 0).astype(jnp.bfloat16)
    o_ref[...] = jnp.dot(w_ref[...], x, preferred_element_type=jnp.float32)


@jax.jit
def fused_add_relu_conv1x1_s2(x119, x133, weight):
    """x119, x133: (N, C_in, H, W) f32.  weight: (C_out, C_in, 1, 1) f32."""
    N, C_in, H, W = x119.shape
    C_out = weight.shape[0]
    Ho = (H - 1) // 2 + 1
    Wo = (W - 1) // 2 + 1
    Mo = Ho * Wo

    # Stride-2 subsample first (exact), flatten spatial, cast to bf16 for the
    # MXU.  All of this fuses into one small XLA op per input under jit; there
    # are no NHWC transposes on inputs, weight, or output.
    a = x119[:, :, ::2, ::2].reshape(N, C_in, Mo).astype(jnp.bfloat16)
    b = x133[:, :, ::2, ::2].reshape(N, C_in, Mo).astype(jnp.bfloat16)
    w = weight.reshape(C_out, C_in).astype(jnp.bfloat16)

    cost = pl.CostEstimate(
        flops=2 * N * Mo * C_in * C_out + 2 * N * Mo * C_in,
        transcendentals=0,
        bytes_accessed=2 * (a.size + b.size + w.size) + 4 * N * C_out * Mo,
    )

    out = pl.pallas_call(
        _add_relu_matmul_kernel,
        out_shape=jax.ShapeDtypeStruct((N, C_out, Mo), jnp.float32),
        grid=(N,),
        in_specs=[
            pl.BlockSpec((C_out, C_in), lambda n: (0, 0)),        # weight, resident
            pl.BlockSpec((None, C_in, Mo), lambda n: (n, 0, 0)),  # a (batch squeezed)
            pl.BlockSpec((None, C_in, Mo), lambda n: (n, 0, 0)),  # b (batch squeezed)
        ],
        out_specs=pl.BlockSpec((None, C_out, Mo), lambda n: (n, 0, 0)),
        compiler_params=pltpu.CompilerParams(
            # Batch axis is independent; on v7x a larger batch shards across
            # the two TensorCores.  For N=1 this is a no-op.
            dimension_semantics=("parallel",),
        ),
        cost_estimate=cost,
    )(w, a, b)

    # (N, C_out, Ho*Wo) -> (N, C_out, Ho, Wo): free reshape, already NCHW.
    return out.reshape(N, C_out, Ho, Wo)


def _reference(x119, x133, weight):
    """Pure-JAX f32 reference mirroring the PyTorch module."""
    x = jnp.maximum(x119 + x133, 0.0)
    return jax.lax.conv_general_dilated(
        x, weight, window_strides=(2, 2), padding="VALID",
        dimension_numbers=("NCHW", "OIHW", "NCHW"))


if __name__ == "__main__":
    key = jax.random.PRNGKey(0)
    k1, k2, k3 = jax.random.split(key, 3)

    # Shapes implied by the module: inputs (1, 120, 28, 28), conv 120 -> 336.
    x119 = jax.random.normal(k1, (1, 120, 28, 28), dtype=jnp.float32)
    x133 = jax.random.normal(k2, (1, 120, 28, 28), dtype=jnp.float32)
    # Deterministic synthetic conv weight (no bias), shape (336, 120, 1, 1).
    weight = jax.random.normal(k3, (336, 120, 1, 1), dtype=jnp.float32) * 0.05

    out = jax.block_until_ready(fused_add_relu_conv1x1_s2(x119, x133, weight))
    ref = jax.block_until_ready(_reference(x119, x133, weight))

    assert out.shape == (1, 336, 14, 14), out.shape
    # bf16 MXU inputs with f32 accumulation over K=120 -> loosened tolerance.
    err = float(jnp.max(jnp.abs(out - ref)))
    assert jnp.allclose(out, ref, atol=5e-2, rtol=5e-2), f"mismatch, max abs err={err}"

    print("KERNEL_OK")
</pallas_src>

<mosaic_0001>
module attributes {stable_mosaic.version = 11 : i64} {
  func.func @_add_relu_matmul_kernel(%arg0: i32, %arg1: memref<336x120xbf16, #tpu.memory_space<vmem>>, %arg2: memref<1x120x196xbf16, #tpu.memory_space<vmem>>, %arg3: memref<1x120x196xbf16, #tpu.memory_space<vmem>>, %arg4: memref<1x336x196xf32, #tpu.memory_space<vmem>>) attributes {dimension_semantics = [#tpu.dimension_semantics<parallel>], iteration_bounds = array<i64: 1>, scalar_prefetch = 0 : i64, scratch_operands = 0 : i64, tpu.core_type = #tpu.core_type<tc>, window_params = [{pipeline_mode = #tpu.pipeline_mode<synchronous>, transform_indices = @transform_0, window_bounds = array<i64: 336, 120>}, {transform_indices = @transform_1, window_bounds = array<i64: 1, 120, 196>}, {transform_indices = @transform_2, window_bounds = array<i64: 1, 120, 196>}, {transform_indices = @transform_3, window_bounds = array<i64: 1, 336, 196>}]} {
    %c0 = arith.constant 0 : index
    %c0_0 = arith.constant 0 : index
    %c0_1 = arith.constant 0 : index
    %0 = vector.load %arg2[%c0, %c0_0, %c0_1] : memref<1x120x196xbf16, #tpu.memory_space<vmem>>, vector<1x120x196xbf16>
    %1 = vector.shape_cast %0 : vector<1x120x196xbf16> to vector<120x196xbf16>
    %c0_2 = arith.constant 0 : index
    %c0_3 = arith.constant 0 : index
    %c0_4 = arith.constant 0 : index
    %2 = vector.load %arg3[%c0_2, %c0_3, %c0_4] : memref<1x120x196xbf16, #tpu.memory_space<vmem>>, vector<1x120x196xbf16>
    %3 = vector.shape_cast %2 : vector<1x120x196xbf16> to vector<120x196xbf16>
    %4 = arith.addf %1, %3 : vector<120x196xbf16>
    %cst = arith.constant 0.000000e+00 : bf16
    %5 = vector.broadcast %cst : bf16 to vector<120x196xbf16>
    %6 = arith.maximumf %4, %5 : vector<120x196xbf16>
    %c0_5 = arith.constant 0 : index
    %c0_6 = arith.constant 0 : index
    %7 = vector.load %arg1[%c0_5, %c0_6] : memref<336x120xbf16, #tpu.memory_space<vmem>>, vector<336x120xbf16>
    %cst_7 = arith.constant dense<0.000000e+00> : vector<336x196xf32>
    %8 = tpu.matmul %7, %6, %cst_7 {dimension_numbers = #tpu.dot_dimension_numbers<[1], [0], [0], [1], [0, 0, 1, 1], [], []>} : vector<336x120xbf16>, vector<120x196xbf16>, vector<336x196xf32> -> vector<336x196xf32>
    %c0_8 = arith.constant 0 : index
    %c0_9 = arith.constant 0 : index
    %c0_10 = arith.constant 0 : index
    %9 = vector.load %arg4[%c0_8, %c0_9, %c0_10] : memref<1x336x196xf32, #tpu.memory_space<vmem>>, vector<1x336x196xf32>
    %10 = vector.shape_cast %9 : vector<1x336x196xf32> to vector<336x196xf32>
    %11 = vector.shape_cast %8 : vector<336x196xf32> to vector<1x336x196xf32>
    tpu.vector_store %arg4[%c0_8, %c0_9, %c0_10], %11 {strides = array<i32>} : memref<1x336x196xf32, #tpu.memory_space<vmem>>, vector<1x336x196xf32>,
    return
  }
  func.func @transform_0(%arg0: i32) -> (i32, i32) {
    %c0_i32 = arith.constant 0 : i32
    %c0_i32_0 = arith.constant 0 : i32
    %c0_i32_1 = arith.constant 0 : i32
    return %c0_i32, %c0_i32_0 : i32, i32
  }
  func.func @transform_1(%arg0: i32) -> (i32, i32, i32) {
    %c0_i32 = arith.constant 0 : i32
    %c0_i32_0 = arith.constant 0 : i32
    %c0_i32_1 = arith.constant 0 : i32
    return %arg0, %c0_i32, %c0_i32_0 : i32, i32, i32
  }
  func.func @transform_2(%arg0: i32) -> (i32, i32, i32) {
    %c0_i32 = arith.constant 0 : i32
    %c0_i32_0 = arith.constant 0 : i32
    %c0_i32_1 = arith.constant 0 : i32
    return %arg0, %c0_i32, %c0_i32_0 : i32, i32, i32
  }
  func.func @transform_3(%arg0: i32) -> (i32, i32, i32) {
    %c0_i32 = arith.constant 0 : i32
    %c0_i32_0 = arith.constant 0 : i32
    %c0_i32_1 = arith.constant 0 : i32
    return %arg0, %c0_i32, %c0_i32_0 : i32, i32, i32
  }
}

</mosaic_0001>

<llo_original>
// kernel: fused_add_relu_conv1x1_s2.1
$region0: #{fused_add_relu_conv1x1_s2.1}
  #allocation0 [shape = 'u32[]', space=smem, size = 0x4, offset = 0x4, fixed_abs, tag = 'smem constant byte address 0x4 - core index']
  #allocation1 [shape = 'u32[144,128]{1,0:T(1,128)}', space=vmem, size = 0x12000, scoped, tag = 'internal scratch']
  %s0 = inlined_call_operand.vmem [shape: bf16[336,120], index: 0, kind: input, shape index: {}]
  %s1 = inlined_call_operand.vmem [shape: bf16[1,120,196], index: 1, kind: input, shape index: {}]
  %s2 = inlined_call_operand.vmem [shape: bf16[1,120,196], index: 2, kind: input, shape index: {}]
  %s3 = inlined_call_operand.vmem [shape: f32[1,336,196], index: 3, kind: output, shape index: {}]
  %s4 = sld [smem:[#allocation0]]
  $region22: #{fused_add_relu_conv1x1_s2.1} parent=0
    _
  %s6 = ssub.s32 1, %s4
  %s7 = scalar_select 0, %s6, %s4
  // Predicated region
  $region2: #{fused_add_relu_conv1x1_s2.1} parent=0 // pred_check
    _
  $region3: #{fused_add_relu_conv1x1_s2.1} parent=0 // pred_check_branch
    %9 = sbr.rel (0) target = $region5
  $region4: #{fused_add_relu_conv1x1_s2.1} parent=0 // pred_region
    _
  $region5: #{fused_add_relu_conv1x1_s2.1} parent=0 // pred_fallthru
    _
  // Predicated region
  $region6: #{fused_add_relu_conv1x1_s2.1} parent=0 // pred_check
    _
  $region7: #{fused_add_relu_conv1x1_s2.1} parent=0 // pred_check_branch
    %11 = sbr.rel (0) target = $region9
  $region8: #{fused_add_relu_conv1x1_s2.1} parent=0 // pred_region
    _
  $region9: #{fused_add_relu_conv1x1_s2.1} parent=0 // pred_fallthru
    _
  // Predicated region
  $region10: #{fused_add_relu_conv1x1_s2.1} parent=0 // pred_check
    _
  $region11: #{fused_add_relu_conv1x1_s2.1} parent=0 // pred_check_branch
    %13 = sbr.rel (0) target = $region13
  $region12: #{fused_add_relu_conv1x1_s2.1} parent=0 // pred_region
    _
  $region13: #{fused_add_relu_conv1x1_s2.1} parent=0 // pred_fallthru
    _
  %v15 = vld [vmem:[%s1] sm:$0xff]
  %v16 = vld [vmem:[%s1 + $0x8] sm:$0xff]
  %v17 = vld [vmem:[%s1 + $0x10] sm:$0xff]
  %v18 = vld [vmem:[%s1 + $0x18] sm:$0xff]
  %v19 = vld [vmem:[%s1 + $0x20] sm:$0xff]
  %v20 = vld [vmem:[%s1 + $0x28] sm:$0xff]
  %v21 = vld [vmem:[%s1 + $0x30] sm:$0xff]
  %v22 = vld [vmem:[%s1 + $0x38] sm:$0xff]
  %v23 = vld [vmem:[%s1 + $0x40] sm:$0xff]
  %v24 = vld [vmem:[%s1 + $0x48] sm:$0xff]
  %v25 = vld [vmem:[%s1 + $0x50] sm:$0xff]
  %v26 = vld [vmem:[%s1 + $0x58] sm:$0xff]
  %v27 = vld [vmem:[%s1 + $0x60] sm:$0xff]
  %v28 = vld [vmem:[%s1 + $0x68] sm:$0xff]
  %v29 = vld [vmem:[%s1 + $0x70] sm:$0xff]
  %v30 = vld [vmem:[%s2] sm:$0xff]
  %v31 = vld [vmem:[%s2 + $0x8] sm:$0xff]
  %v32 = vld [vmem:[%s2 + $0x10] sm:$0xff]
  %v33 = vld [vmem:[%s2 + $0x18] sm:$0xff]
  %v34 = vld [vmem:[%s2 + $0x20] sm:$0xff]
  %v35 = vld [vmem:[%s2 + $0x28] sm:$0xff]
  %v36 = vld [vmem:[%s2 + $0x30] sm:$0xff]
  %v37 = vld [vmem:[%s2 + $0x38] sm:$0xff]
  %v38 = vld [vmem:[%s2 + $0x40] sm:$0xff]
  %v39 = vld [vmem:[%s2 + $0x48] sm:$0xff]
  %v40 = vld [vmem:[%s2 + $0x50] sm:$0xff]
  %v41 = vld [vmem:[%s2 + $0x58] sm:$0xff]
  %v42 = vld [vmem:[%s2 + $0x60] sm:$0xff]
  %v43 = vld [vmem:[%s2 + $0x68] sm:$0xff]
  %v44 = vld [vmem:[%s2 + $0x70] sm:$0xff]
  %v45 = vadd.bf16 %v15, %v30
  %v46 = vadd.bf16 %v16, %v31
  %v47 = vadd.bf16 %v17, %v32
  %v48 = vadd.bf16 %v18, %v33
  %v49 = vadd.bf16 %v19, %v34
  %v50 = vadd.bf16 %v20, %v35
  %v51 = vadd.bf16 %v21, %v36
  %v52 = vadd.bf16 %v22, %v37
  %v53 = vadd.bf16 %v23, %v38
  %v54 = vadd.bf16 %v24, %v39
  %v55 = vadd.bf16 %v25, %v40
  %v56 = vadd.bf16 %v26, %v41
  %v57 = vadd.bf16 %v27, %v42
  %v58 = vadd.bf16 %v28, %v43
  %v59 = vadd.bf16 %v29, %v44
  %v60 = vmax.bf16 %v45, 0
  %v61 = vmax.bf16 %v46, 0
  %v62 = vmax.bf16 %v47, 0
  %v63 = vmax.bf16 %v48, 0
  %v64 = vmax.bf16 %v49, 0
  %v65 = vmax.bf16 %v50, 0
  %v66 = vmax.bf16 %v51, 0
  %v67 = vmax.bf16 %v52, 0
  %v68 = vmax.bf16 %v53, 0
  %v69 = vmax.bf16 %v54, 0
  %v70 = vmax.bf16 %v55, 0
  %v71 = vmax.bf16 %v56, 0
  %v72 = vmax.bf16 %v57, 0
  %v73 = vmax.bf16 %v58, 0
  %v74 = vmax.bf16 %v59, 0
  %v75 = vld [vmem:[%s0] sm:$0xf]
  %v76 = vld [vmem:[%s0 + $0x4] sm:$0xf]
  %v77 = vld [vmem:[%s0 + $0x8] sm:$0xf]
  %v78 = vld [vmem:[%s0 + $0xc] sm:$0xf]
  %v79 = vld [vmem:[%s0 + $0x10] sm:$0xf]
  %v80 = vld [vmem:[%s0 + $0x14] sm:$0xf]
  %v81 = vld [vmem:[%s0 + $0x18] sm:$0xf]
  %v82 = vld [vmem:[%s0 + $0x1c] sm:$0xf]
  %v83 = vld [vmem:[%s0 + $0x20] sm:$0xf]
  %v84 = vld [vmem:[%s0 + $0x24] sm:$0xf]
  %v85 = vld [vmem:[%s0 + $0x28] sm:$0xf]
  %v86 = vld [vmem:[%s0 + $0x2c] sm:$0xf]
  %v87 = vld [vmem:[%s0 + $0x30] sm:$0xf]
  %v88 = vld [vmem:[%s0 + $0x34] sm:$0xf]
  %v89 = vld [vmem:[%s0 + $0x38] sm:$0xf]
  %v90 = vld [vmem:[%s0 + $0x3c] sm:$0xf]
  %v91 = vld [vmem:[%s0 + $0x40] sm:$0xf]
  %v92 = vld [vmem:[%s0 + $0x44] sm:$0xf]
  %v93 = vld [vmem:[%s0 + $0x48] sm:$0xf]
  %v94 = vld [vmem:[%s0 + $0x4c] sm:$0xf]
  %v95 = vld [vmem:[%s0 + $0x50] sm:$0xf]
  %v96 = vld [vmem:[%s0 + $0x54] sm:$0xf]
  %v97 = vld [vmem:[%s0 + $0x58] sm:$0xf]
  %v98 = vld [vmem:[%s0 + $0x5c] sm:$0xf]
  %v99 = vld [vmem:[%s0 + $0x60] sm:$0xf]
  %v100 = vld [vmem:[%s0 + $0x64] sm:$0xf]
  %v101 = vld [vmem:[%s0 + $0x68] sm:$0xf]
  %v102 = vld [vmem:[%s0 + $0x6c] sm:$0xf]
  %v103 = vld [vmem:[%s0 + $0x70] sm:$0xf]
  %v104 = vld [vmem:[%s0 + $0x74] sm:$0xf]
  %v105 = vld [vmem:[%s0 + $0x78] sm:$0xf]
  %v106 = vld [vmem:[%s0 + $0x7c] sm:$0xf]
  %v107 = vld [vmem:[%s0 + $0x80] sm:$0xf]
  %v108 = vld [vmem:[%s0 + $0x84] sm:$0xf]
  %v109 = vld [vmem:[%s0 + $0x88] sm:$0xf]
  %v110 = vld [vmem:[%s0 + $0x8c] sm:$0xf]
  %v111 = vld [vmem:[%s0 + $0x90] sm:$0xf]
  %v112 = vld [vmem:[%s0 + $0x94] sm:$0xf]
  %v113 = vld [vmem:[%s0 + $0x98] sm:$0xf]
  %v114 = vld [vmem:[%s0 + $0x9c] sm:$0xf]
  %v115 = vld [vmem:[%s0 + $0xa0] sm:$0xf]
  %v116 = vld [vmem:[%s0 + $0xa4] sm:$0xf]
  %v159 = vunpack.c.l.b16 %v75
  %v160 = vunpack.c.l.b16 %v76
  %v161 = vunpack.c.l.b16 %v77
  %v162 = vunpack.c.l.b16 %v78
  %v163 = vunpack.c.l.b16 %v79
  %v164 = vunpack.c.l.b16 %v80
  %v165 = vunpack.c.l.b16 %v81
  %v166 = vunpack.c.l.b16 %v82
  %v167 = vunpack.c.l.b16 %v83
  %v168 = vunpack.c.l.b16 %v84
  %v169 = vunpack.c.l.b16 %v85
  %v170 = vunpack.c.l.b16 %v86
  %v171 = vunpack.c.l.b16 %v87
  %v172 = vunpack.c.l.b16 %v88
  %v173 = vunpack.c.l.b16 %v89
  %v174 = vunpack.c.l.b16 %v90
  %v175 = vunpack.c.l.b16 %v91
  %v176 = vunpack.c.l.b16 %v92
  %v177 = vunpack.c.l.b16 %v93
  %v178 = vunpack.c.l.b16 %v94
  %v179 = vunpack.c.l.b16 %v95
  %v180 = vunpack.c.l.b16 %v96
  %v181 = vunpack.c.l.b16 %v97
  %v182 = vunpack.c.l.b16 %v98
  %v183 = vunpack.c.l.b16 %v99
  %v184 = vunpack.c.l.b16 %v100
  %v185 = vunpack.c.l.b16 %v101
  %v186 = vunpack.c.l.b16 %v102
  %v187 = vunpack.c.l.b16 %v103
  %v188 = vunpack.c.l.b16 %v104
  %v189 = vunpack.c.l.b16 %v105
  %v190 = vunpack.c.l.b16 %v106
  %v191 = vunpack.c.l.b16 %v107
  %v192 = vunpack.c.l.b16 %v108
  %v193 = vunpack.c.l.b16 %v109
  %v194 = vunpack.c.l.b16 %v110
  %v195 = vunpack.c.l.b16 %v111
  %v196 = vunpack.c.l.b16 %v112
  %v197 = vunpack.c.l.b16 %v113
  %v198 = vunpack.c.l.b16 %v114
  %v199 = vunpack.c.l.b16 %v115
  %v200 = vunpack.c.l.b16 %v116
  %v201 = vpack.c.b16 %v160, %v159
  %v202 = vpack.c.b16 %v162, %v161
  %v203 = vpack.c.b16 %v164, %v163
  %v204 = vpack.c.b16 %v166, %v165
  %v205 = vpack.c.b16 %v168, %v167
  %v206 = vpack.c.b16 %v170, %v169
  %v207 = vpack.c.b16 %v172, %v171
  %v208 = vpack.c.b16 %v174, %v173
  %v209 = vpack.c.b16 %v176, %v175
  %v210 = vpack.c.b16 %v178, %v177
  %v211 = vpack.c.b16 %v180, %v179
  %v212 = vpack.c.b16 %v182, %v181
  %v213 = vpack.c.b16 %v184, %v183
  %v214 = vpack.c.b16 %v186, %v185
  %v215 = vpack.c.b16 %v188, %v187
  %v216 = vpack.c.b16 %v190, %v189
  %v217 = vpack.c.b16 %v192, %v191
  %v218 = vpack.c.b16 %v194, %v193
  %v219 = vpack.c.b16 %v196, %v195
  %v220 = vpack.c.b16 %v198, %v197
  %v221 = vpack.c.b16 %v200, %v199
  %v237 = vunpack.c.l.b16 %v60
  %v238 = vunpack.c.h.b16 %v60
  %v239 = vunpack.c.l.b16 %v61
  %v240 = vunpack.c.h.b16 %v61
  %v241 = vunpack.c.l.b16 %v62
  %v242 = vunpack.c.h.b16 %v62
  %v243 = vunpack.c.l.b16 %v63
  %v244 = vunpack.c.h.b16 %v63
  %v245 = vunpack.c.l.b16 %v64
  %v246 = vunpack.c.h.b16 %v64
  %v247 = vunpack.c.l.b16 %v65
  %v248 = vunpack.c.h.b16 %v65
  %v249 = vunpack.c.l.b16 %v66
  %v250 = vunpack.c.h.b16 %v66
  %v251 = vunpack.c.l.b16 %v67
  %v252 = vunpack.c.h.b16 %v67
  %v253 = vunpack.c.l.b16 %v68
  %v254 = vunpack.c.h.b16 %v68
  %v255 = vunpack.c.l.b16 %v69
  %v256 = vunpack.c.h.b16 %v69
  %v257 = vunpack.c.l.b16 %v70
  %v258 = vunpack.c.h.b16 %v70
  %v259 = vunpack.c.l.b16 %v71
  %v260 = vunpack.c.h.b16 %v71
  %v261 = vunpack.c.l.b16 %v72
  %v262 = vunpack.c.h.b16 %v72
  %v263 = vunpack.c.l.b16 %v73
  %v264 = vunpack.c.h.b16 %v73
  %v265 = vunpack.c.l.b16 %v74
  %v266 = vunpack.c.h.b16 %v74
  %v267 = vpack.c.b16 %v239, %v237
  %v268 = vpack.c.b16 %v240, %v238
  %v269 = vpack.c.b16 %v243, %v241
  %v270 = vpack.c.b16 %v244, %v242
  %v271 = vpack.c.b16 %v247, %v245
  %v272 = vpack.c.b16 %v248, %v246
  %v273 = vpack.c.b16 %v251, %v249
  %v274 = vpack.c.b16 %v252, %v250
  %v275 = vpack.c.b16 %v255, %v253
  %v276 = vpack.c.b16 %v256, %v254
  %v277 = vpack.c.b16 %v259, %v257
  %v278 = vpack.c.b16 %v260, %v258
  %v279 = vpack.c.b16 %v263, %v261
  %v280 = vpack.c.b16 %v264, %v262
  %v281 = vpack.c.b16 %v265, %v265
  %v282 = vpack.c.b16 %v266, %v266
  %vm297 = vcmask 982016
  %v299 = vsel %vm297, %v201, 0
  %v302 = vsel %vm297, %v202, 0
  %v305 = vsel %vm297, %v203, 0
  %v308 = vsel %vm297, %v204, 0
  %v311 = vsel %vm297, %v205, 0
  %v314 = vsel %vm297, %v206, 0
  %v317 = vsel %vm297, %v207, 0
  %v320 = vsel %vm297, %v208, 0
  %v323 = vsel %vm297, %v209, 0
  %v326 = vsel %vm297, %v210, 0
  %v329 = vsel %vm297, %v211, 0
  %v332 = vsel %vm297, %v212, 0
  %v335 = vsel %vm297, %v213, 0
  %v338 = vsel %vm297, %v214, 0
  %v341 = vsel %vm297, %v215, 0
  %v344 = vsel %vm297, %v216, 0
  %v347 = vsel %vm297, %v217, 0
  %v350 = vsel %vm297, %v218, 0
  %v353 = vsel %vm297, %v219, 0
  %v356 = vsel %vm297, %v220, 0
  %v359 = vsel %vm297, %v221, 0
  %vm361 = vcmask 1043456
  %v363 = vsel %vm361, %v281, 0
  %v366 = vsel %vm361, %v282, 0
  %368 = vmatprep.subr.bf16.mxu0 %v366
  %369 = vmatpush1.bf16.msra.mxu0 %v363
  %370 = vmatprep.subr.bf16.mxu0 %v280
  %371 = vmatpush1.bf16.msra.mxu0 %v279
  %372 = vmatprep.subr.bf16.mxu0 %v278
  %373 = vmatpush1.bf16.msra.mxu0 %v277
  %374 = vmatprep.subr.bf16.mxu0 %v276
  %375 = vmatpush1.bf16.msra.mxu0 %v275
  %376 = vmatprep.subr.bf16.mxu0 %v274
  %377 = vmatpush1.bf16.msra.mxu0 %v273
  %378 = vmatprep.subr.bf16.mxu0 %v272
  %379 = vmatpush1.bf16.msra.mxu0 %v271
  %380 = vmatprep.subr.bf16.mxu0 %v270
  %381 = vmatpush1.bf16.msra.mxu0 %v269
  %382 = vmatprep.subr.bf16.mxu0 %v268
  %383 = vmatpush1.bf16.msra.mxu0 %v267
  %384 = vmatprep.subr.bf16.mxu0 0
  %385 = vmatpush2.bf16.msra.mxu0 0
  %386 = vmatprep.subr.bf16.mxu0 0
  %387 = vmatpush2.bf16.msra.mxu0 0
  %388 = vmatprep.subr.bf16.mxu0 0
  %389 = vmatpush2.bf16.msra.mxu0 0
  %390 = vmatprep.subr.bf16.mxu0 0
  %391 = vmatpush2.bf16.msra.mxu0 0
  %392 = vmatprep.subr.bf16.mxu0 0
  %393 = vmatpush2.bf16.msra.mxu0 0
  %394 = vmatprep.subr.bf16.mxu0 0
  %395 = vmatpush2.bf16.msra.mxu0 0
  %396 = vmatprep.subr.bf16.mxu0 0
  %397 = vmatpush2.bf16.msra.mxu0 0
  %398 = vmatprep.subr.bf16.mxu0 0
  %399 = vmatpush2.bf16.msra.mxu0 0
  %400 = vmatprep.mubr.bf16.mxu0 0
  %401 = vmatmul.mubr.bf16.gmra.mxu0 %v299
  %v402 = vpop.f32.mrf.mxu0
  %v403 = vadd.f32 0.0, %v402
  %v404 = vpop.f32.mrf.mxu0
  %v405 = vadd.f32 0.0, %v404
  %v406 = vpop.f32.mrf.mxu0
  %v407 = vadd.f32 0.0, %v406
  %v408 = vpop.f32.mrf.mxu0
  %v409 = vadd.f32 0.0, %v408
  %410 = vmatprep.mubr.bf16.mxu0 0
  %411 = vmatmul.mubr.bf16.gmra.mxu0 %v302
  %v412 = vpop.f32.mrf.mxu0
  %v413 = vadd.f32 0.0, %v412
  %v414 = vpop.f32.mrf.mxu0
  %v415 = vadd.f32 0.0, %v414
  %v416 = vpop.f32.mrf.mxu0
  %v417 = vadd.f32 0.0, %v416
  %v418 = vpop.f32.mrf.mxu0
  %v419 = vadd.f32 0.0, %v418
  %420 = vmatprep.mubr.bf16.mxu0 0
  %421 = vmatmul.mubr.bf16.gmra.mxu0 %v305
  %v422 = vpop.f32.mrf.mxu0
  %v423 = vadd.f32 0.0, %v422
  %v424 = vpop.f32.mrf.mxu0
  %v425 = vadd.f32 0.0, %v424
  %v426 = vpop.f32.mrf.mxu0
  %v427 = vadd.f32 0.0, %v426
  %v428 = vpop.f32.mrf.mxu0
  %v429 = vadd.f32 0.0, %v428
  %430 = vmatprep.mubr.bf16.mxu0 0
  %431 = vmatmul.mubr.bf16.gmra.mxu0 %v308
  %v432 = vpop.f32.mrf.mxu0
  %v433 = vadd.f32 0.0, %v432
  %v434 = vpop.f32.mrf.mxu0
  %v435 = vadd.f32 0.0, %v434
  %v436 = vpop.f32.mrf.mxu0
  %v437 = vadd.f32 0.0, %v436
  %v438 = vpop.f32.mrf.mxu0
  %v439 = vadd.f32 0.0, %v438
  %440 = vmatprep.mubr.bf16.mxu0 0
  %441 = vmatmul.mubr.bf16.gmra.mxu0 %v311
  %v442 = vpop.f32.mrf.mxu0
  %v443 = vadd.f32 0.0, %v442
  %v444 = vpop.f32.mrf.mxu0
  %v445 = vadd.f32 0.0, %v444
  %v446 = vpop.f32.mrf.mxu0
  %v447 = vadd.f32 0.0, %v446
  %v448 = vpop.f32.mrf.mxu0
  %v449 = vadd.f32 0.0, %v448
  %450 = vmatprep.mubr.bf16.mxu0 0
  %451 = vmatmul.mubr.bf16.gmra.mxu0 %v314
  %v452 = vpop.f32.mrf.mxu0
  %v453 = vadd.f32 0.0, %v452
  %v454 = vpop.f32.mrf.mxu0
  %v455 = vadd.f32 0.0, %v454
  %v456 = vpop.f32.mrf.mxu0
  %v457 = vadd.f32 0.0, %v456
  %v458 = vpop.f32.mrf.mxu0
  %v459 = vadd.f32 0.0, %v458
  %460 = vmatprep.mubr.bf16.mxu0 0
  %461 = vmatmul.mubr.bf16.gmra.mxu0 %v317
  %v462 = vpop.f32.mrf.mxu0
  %v463 = vadd.f32 0.0, %v462
  %v464 = vpop.f32.mrf.mxu0
  %v465 = vadd.f32 0.0, %v464
  %v466 = vpop.f32.mrf.mxu0
  %v467 = vadd.f32 0.0, %v466
  %v468 = vpop.f32.mrf.mxu0
  %v469 = vadd.f32 0.0, %v468
  %470 = vmatprep.mubr.bf16.mxu0 0
  %471 = vmatmul.mubr.bf16.gmra.mxu0 %v320
  %v472 = vpop.f32.mrf.mxu0
  %v473 = vadd.f32 0.0, %v472
  %v474 = vpop.f32.mrf.mxu0
  %v475 = vadd.f32 0.0, %v474
  %v476 = vpop.f32.mrf.mxu0
  %v477 = vadd.f32 0.0, %v476
  %v478 = vpop.f32.mrf.mxu0
  %v479 = vadd.f32 0.0, %v478
  %480 = vmatprep.mubr.bf16.mxu0 0
  %481 = vmatmul.mubr.bf16.gmra.mxu0 %v323
  %v482 = vpop.f32.mrf.mxu0
  %v483 = vadd.f32 0.0, %v482
  %v484 = vpop.f32.mrf.mxu0
  %v485 = vadd.f32 0.0, %v484
  %v486 = vpop.f32.mrf.mxu0
  %v487 = vadd.f32 0.0, %v486
  %v488 = vpop.f32.mrf.mxu0
  %v489 = vadd.f32 0.0, %v488
  %490 = vmatprep.mubr.bf16.mxu0 0
  %491 = vmatmul.mubr.bf16.gmra.mxu0 %v326
  %v492 = vpop.f32.mrf.mxu0
  %v493 = vadd.f32 0.0, %v492
  %v494 = vpop.f32.mrf.mxu0
  %v495 = vadd.f32 0.0, %v494
  %v496 = vpop.f32.mrf.mxu0
  %v497 = vadd.f32 0.0, %v496
  %v498 = vpop.f32.mrf.mxu0
  %v499 = vadd.f32 0.0, %v498
  %500 = vmatprep.mubr.bf16.mxu0 0
  %501 = vmatmul.mubr.bf16.gmra.mxu0 %v329
  %v502 = vpop.f32.mrf.mxu0
  %v503 = vadd.f32 0.0, %v502
  %v504 = vpop.f32.mrf.mxu0
  %v505 = vadd.f32 0.0, %v504
  %v506 = vpop.f32.mrf.mxu0
  %v507 = vadd.f32 0.0, %v506
  %v508 = vpop.f32.mrf.mxu0
  %v509 = vadd.f32 0.0, %v508
  %510 = vmatprep.mubr.bf16.mxu0 0
  %511 = vmatmul.mubr.bf16.gmra.mxu0 %v332
  %v512 = vpop.f32.mrf.mxu0
  %v513 = vadd.f32 0.0, %v512
  %v514 = vpop.f32.mrf.mxu0
  %v515 = vadd.f32 0.0, %v514
  %v516 = vpop.f32.mrf.mxu0
  %v517 = vadd.f32 0.0, %v516
  %v518 = vpop.f32.mrf.mxu0
  %v519 = vadd.f32 0.0, %v518
  %520 = vmatprep.mubr.bf16.mxu0 0
  %521 = vmatmul.mubr.bf16.gmra.mxu0 %v335
  %v522 = vpop.f32.mrf.mxu0
  %v523 = vadd.f32 0.0, %v522
  %v524 = vpop.f32.mrf.mxu0
  %v525 = vadd.f32 0.0, %v524
  %v526 = vpop.f32.mrf.mxu0
  %v527 = vadd.f32 0.0, %v526
  %v528 = vpop.f32.mrf.mxu0
  %v529 = vadd.f32 0.0, %v528
  %530 = vmatprep.mubr.bf16.mxu0 0
  %531 = vmatmul.mubr.bf16.gmra.mxu0 %v338
  %v532 = vpop.f32.mrf.mxu0
  %v533 = vadd.f32 0.0, %v532
  %v534 = vpop.f32.mrf.mxu0
  %v535 = vadd.f32 0.0, %v534
  %v536 = vpop.f32.mrf.mxu0
  %v537 = vadd.f32 0.0, %v536
  %v538 = vpop.f32.mrf.mxu0
  %v539 = vadd.f32 0.0, %v538
  %540 = vmatprep.mubr.bf16.mxu0 0
  %541 = vmatmul.mubr.bf16.gmra.mxu0 %v341
  %v542 = vpop.f32.mrf.mxu0
  %v543 = vadd.f32 0.0, %v542
  %v544 = vpop.f32.mrf.mxu0
  %v545 = vadd.f32 0.0, %v544
  %v546 = vpop.f32.mrf.mxu0
  %v547 = vadd.f32 0.0, %v546
  %v548 = vpop.f32.mrf.mxu0
  %v549 = vadd.f32 0.0, %v548
  %550 = vmatprep.mubr.bf16.mxu0 0
  %551 = vmatmul.mubr.bf16.gmra.mxu0 %v344
  %v552 = vpop.f32.mrf.mxu0
  %v553 = vadd.f32 0.0, %v552
  %v554 = vpop.f32.mrf.mxu0
  %v555 = vadd.f32 0.0, %v554
  %v556 = vpop.f32.mrf.mxu0
  %v557 = vadd.f32 0.0, %v556
  %v558 = vpop.f32.mrf.mxu0
  %v559 = vadd.f32 0.0, %v558
  %560 = vmatprep.mubr.bf16.mxu0 0
  %561 = vmatmul.mubr.bf16.gmra.mxu0 %v347
  %v562 = vpop.f32.mrf.mxu0
  %v563 = vadd.f32 0.0, %v562
  %v564 = vpop.f32.mrf.mxu0
  %v565 = vadd.f32 0.0, %v564
  %v566 = vpop.f32.mrf.mxu0
  %v567 = vadd.f32 0.0, %v566
  %v568 = vpop.f32.mrf.mxu0
  %v569 = vadd.f32 0.0, %v568
  %570 = vmatprep.mubr.bf16.mxu0 0
  %571 = vmatmul.mubr.bf16.gmra.mxu0 %v350
  %v572 = vpop.f32.mrf.mxu0
  %v573 = vadd.f32 0.0, %v572
  %v574 = vpop.f32.mrf.mxu0
  %v575 = vadd.f32 0.0, %v574
  %v576 = vpop.f32.mrf.mxu0
  %v577 = vadd.f32 0.0, %v576
  %v578 = vpop.f32.mrf.mxu0
  %v579 = vadd.f32 0.0, %v578
  %580 = vmatprep.mubr.bf16.mxu0 0
  %581 = vmatmul.mubr.bf16.gmra.mxu0 %v353
  %v582 = vpop.f32.mrf.mxu0
  %v583 = vadd.f32 0.0, %v582
  %v584 = vpop.f32.mrf.mxu0
  %v585 = vadd.f32 0.0, %v584
  %v586 = vpop.f32.mrf.mxu0
  %v587 = vadd.f32 0.0, %v586
  %v588 = vpop.f32.mrf.mxu0
  %v589 = vadd.f32 0.0, %v588
  %590 = vmatprep.mubr.bf16.mxu0 0
  %591 = vmatmul.mubr.bf16.gmra.mxu0 %v356
  %v592 = vpop.f32.mrf.mxu0
  %v593 = vadd.f32 0.0, %v592
  %v594 = vpop.f32.mrf.mxu0
  %v595 = vadd.f32 0.0, %v594
  %v596 = vpop.f32.mrf.mxu0
  %v597 = vadd.f32 0.0, %v596
  %v598 = vpop.f32.mrf.mxu0
  %v599 = vadd.f32 0.0, %v598
  %600 = vmatprep.mubr.bf16.mxu0 0
  %601 = vmatmul.mubr.bf16.gmra.mxu0 %v359
  %v602 = vpop.f32.mrf.mxu0
  %v603 = vadd.f32 0.0, %v602
  %v604 = vpop.f32.mrf.mxu0
  %v605 = vadd.f32 0.0, %v604
  %v606 = vpop.f32.mrf.mxu0
  %v607 = vadd.f32 0.0, %v606
  %v608 = vpop.f32.mrf.mxu0
  %v609 = vadd.f32 0.0, %v608
  %610 = vdwg.mxu0
  %611 = vst [vmem:[%s3] sm:$0xff] %v403
  %vm612 = vcmask 556032
  %613 = vst.msk [vmem:[%s3 + $0x8] sm:$0xff] %vm612, %v405
  %614 = vst [vmem:[%s3 + $0x10] sm:$0xff] %v407
  %615 = vst.msk [vmem:[%s3 + $0x18] sm:$0xff] %vm612, %v409
  %616 = vst [vmem:[%s3 + $0x20] sm:$0xff] %v413
  %617 = vst.msk [vmem:[%s3 + $0x28] sm:$0xff] %vm612, %v415
  %618 = vst [vmem:[%s3 + $0x30] sm:$0xff] %v417
  %619 = vst.msk [vmem:[%s3 + $0x38] sm:$0xff] %vm612, %v419
  %620 = vst [vmem:[%s3 + $0x40] sm:$0xff] %v423
  %621 = vst.msk [vmem:[%s3 + $0x48] sm:$0xff] %vm612, %v425
  %622 = vst [vmem:[%s3 + $0x50] sm:$0xff] %v427
  %623 = vst.msk [vmem:[%s3 + $0x58] sm:$0xff] %vm612, %v429
  %624 = vst [vmem:[%s3 + $0x60] sm:$0xff] %v433
  %625 = vst.msk [vmem:[%s3 + $0x68] sm:$0xff] %vm612, %v435
  %626 = vst [vmem:[%s3 + $0x70] sm:$0xff] %v437
  %627 = vst.msk [vmem:[%s3 + $0x78] sm:$0xff] %vm612, %v439
  %628 = vst [vmem:[%s3 + $0x80] sm:$0xff] %v443
  %629 = vst.msk [vmem:[%s3 + $0x88] sm:$0xff] %vm612, %v445
  %630 = vst [vmem:[%s3 + $0x90] sm:$0xff] %v447
  %631 = vst.msk [vmem:[%s3 + $0x98] sm:$0xff] %vm612, %v449
  %632 = vst [vmem:[%s3 + $0xa0] sm:$0xff] %v453
  %633 = vst.msk [vmem:[%s3 + $0xa8] sm:$0xff] %vm612, %v455
  %634 = vst [vmem:[%s3 + $0xb0] sm:$0xff] %v457
  %635 = vst.msk [vmem:[%s3 + $0xb8] sm:$0xff] %vm612, %v459
  %636 = vst [vmem:[%s3 + $0xc0] sm:$0xff] %v463
  %637 = vst.msk [vmem:[%s3 + $0xc8] sm:$0xff] %vm612, %v465
  %638 = vst [vmem:[%s3 + $0xd0] sm:$0xff] %v467
  %639 = vst.msk [vmem:[%s3 + $0xd8] sm:$0xff] %vm612, %v469
  %640 = vst [vmem:[%s3 + $0xe0] sm:$0xff] %v473
  %641 = vst.msk [vmem:[%s3 + $0xe8] sm:$0xff] %vm612, %v475
  %642 = vst [vmem:[%s3 + $0xf0] sm:$0xff] %v477
  %643 = vst.msk [vmem:[%s3 + $0xf8] sm:$0xff] %vm612, %v479
  %644 = vst [vmem:[%s3 + $0x100] sm:$0xff] %v483
  %645 = vst.msk [vmem:[%s3 + $0x108] sm:$0xff] %vm612, %v485
  %646 = vst [vmem:[%s3 + $0x110] sm:$0xff] %v487
  %647 = vst.msk [vmem:[%s3 + $0x118] sm:$0xff] %vm612, %v489
  %648 = vst [vmem:[%s3 + $0x120] sm:$0xff] %v493
  %649 = vst.msk [vmem:[%s3 + $0x128] sm:$0xff] %vm612, %v495
  %650 = vst [vmem:[%s3 + $0x130] sm:$0xff] %v497
  %651 = vst.msk [vmem:[%s3 + $0x138] sm:$0xff] %vm612, %v499
  %652 = vst [vmem:[%s3 + $0x140] sm:$0xff] %v503
  %653 = vst.msk [vmem:[%s3 + $0x148] sm:$0xff] %vm612, %v505
  %654 = vst [vmem:[%s3 + $0x150] sm:$0xff] %v507
  %655 = vst.msk [vmem:[%s3 + $0x158] sm:$0xff] %vm612, %v509
  %656 = vst [vmem:[%s3 + $0x160] sm:$0xff] %v513
  %657 = vst.msk [vmem:[%s3 + $0x168] sm:$0xff] %vm612, %v515
  %658 = vst [vmem:[%s3 + $0x170] sm:$0xff] %v517
  %659 = vst.msk [vmem:[%s3 + $0x178] sm:$0xff] %vm612, %v519
  %660 = vst [vmem:[%s3 + $0x180] sm:$0xff] %v523
  %661 = vst.msk [vmem:[%s3 + $0x188] sm:$0xff] %vm612, %v525
  %662 = vst [vmem:[%s3 + $0x190] sm:$0xff] %v527
  %663 = vst.msk [vmem:[%s3 + $0x198] sm:$0xff] %vm612, %v529
  %664 = vst [vmem:[%s3 + $0x1a0] sm:$0xff] %v533
  %665 = vst.msk [vmem:[%s3 + $0x1a8] sm:$0xff] %vm612, %v535
  %666 = vst [vmem:[%s3 + $0x1b0] sm:$0xff] %v537
  %667 = vst.msk [vmem:[%s3 + $0x1b8] sm:$0xff] %vm612, %v539
  %668 = vst [vmem:[%s3 + $0x1c0] sm:$0xff] %v543
  %669 = vst.msk [vmem:[%s3 + $0x1c8] sm:$0xff] %vm612, %v545
  %670 = vst [vmem:[%s3 + $0x1d0] sm:$0xff] %v547
  %671 = vst.msk [vmem:[%s3 + $0x1d8] sm:$0xff] %vm612, %v549
  %672 = vst [vmem:[%s3 + $0x1e0] sm:$0xff] %v553
  %673 = vst.msk [vmem:[%s3 + $0x1e8] sm:$0xff] %vm612, %v555
  %674 = vst [vmem:[%s3 + $0x1f0] sm:$0xff] %v557
  %675 = vst.msk [vmem:[%s3 + $0x1f8] sm:$0xff] %vm612, %v559
  %676 = vst [vmem:[%s3 + $0x200] sm:$0xff] %v563
  %677 = vst.msk [vmem:[%s3 + $0x208] sm:$0xff] %vm612, %v565
  %678 = vst [vmem:[%s3 + $0x210] sm:$0xff] %v567
  %679 = vst.msk [vmem:[%s3 + $0x218] sm:$0xff] %vm612, %v569
  %680 = vst [vmem:[%s3 + $0x220] sm:$0xff] %v573
  %681 = vst.msk [vmem:[%s3 + $0x228] sm:$0xff] %vm612, %v575
  %682 = vst [vmem:[%s3 + $0x230] sm:$0xff] %v577
  %683 = vst.msk [vmem:[%s3 + $0x238] sm:$0xff] %vm612, %v579
  %684 = vst [vmem:[%s3 + $0x240] sm:$0xff] %v583
  %685 = vst.msk [vmem:[%s3 + $0x248] sm:$0xff] %vm612, %v585
  %686 = vst [vmem:[%s3 + $0x250] sm:$0xff] %v587
  %687 = vst.msk [vmem:[%s3 + $0x258] sm:$0xff] %vm612, %v589
  %688 = vst [vmem:[%s3 + $0x260] sm:$0xff] %v593
  %689 = vst.msk [vmem:[%s3 + $0x268] sm:$0xff] %vm612, %v595
  %690 = vst [vmem:[%s3 + $0x270] sm:$0xff] %v597
  %691 = vst.msk [vmem:[%s3 + $0x278] sm:$0xff] %vm612, %v599
  %692 = vst [vmem:[%s3 + $0x280] sm:$0xff] %v603
  %693 = vst.msk [vmem:[%s3 + $0x288] sm:$0xff] %vm612, %v605
  %694 = vst [vmem:[%s3 + $0x290] sm:$0xff] %v607
  %695 = vst.msk [vmem:[%s3 + $0x298] sm:$0xff] %vm612, %v609
  // Predicated region
  $region14: #{fused_add_relu_conv1x1_s2.1} parent=0 // pred_check
    _
  $region15: #{fused_add_relu_conv1x1_s2.1} parent=0 // pred_check_branch
    %697 = sbr.rel (0) target = $region17
  $region16: #{fused_add_relu_conv1x1_s2.1} parent=0 // pred_region
    _
  $region17: #{fused_add_relu_conv1x1_s2.1} parent=0 // pred_fallthru
    _
  // Predicated region
  $region18: #{fused_add_relu_conv1x1_s2.1} parent=0 // pred_check
    _
  $region19: #{fused_add_relu_conv1x1_s2.1} parent=0 // pred_check_branch
    %699 = sbr.rel (0) target = $region21
  $region20: #{fused_add_relu_conv1x1_s2.1} parent=0 // pred_region
    _
  $region21: #{fused_add_relu_conv1x1_s2.1} parent=0 // pred_fallthru
    _

</llo_original>
